<compile_context>
chip_gen: v5e
topology: v5e:2x2
jax: 0.10.0
libtpu: 0.0.40
codegen_flags: <defaults>
</compile_context>

<pallas_src>
import jax
import jax.numpy as jnp
import numpy as np
from jax import lax
from jax.experimental import pallas as pl
from jax.experimental.pallas import tpu as pltpu


def _tatt1_kernel(sA_ref, sB_ref, A_ref, w2sel_ref, vblk_ref, params_ref, out_ref):
    """Fused TATT_1 forward.

    sA_ref:     (B*T, B*C*N) bf16  block-diag-over-B seq, rows=(b,t), col blocks=(b',(c,n))
    sB_ref:     (B*C, N*T)   bf16  seq with rows=(b,c), cols=(n,t)  (lane-dense, N*T=128)
    A_ref:      (B*C*N, B*C) bf16  kron(I_B, A) with A[(c,n), c'] = w1[c] * w[n, c']
    w2sel_ref:  (N*T, T)     bf16  w2sel[(n,t), t'] = w2[n] * (t == t')
    vblk_ref:   (B*T, B*T)   bf16  kron(I_B, v)
    params_ref: (B*T+2, T)   f32   rows [0:B*T] = b tiled per batch, row B*T = gamma,
                                   row B*T+1 = beta
    out_ref:    (B*T, T)     f32   softmax(BN(v @ sigmoid(m1 @ f2 + b))), rows=(b,t)
    """
    eps = 1e-5
    bf16 = jnp.bfloat16
    n_rows = sA_ref.shape[0]            # B*T
    inv_n = 1.0 / n_rows

    b_bias = params_ref[0:n_rows, :]                       # (B*T, T) f32
    gamma = params_ref[n_rows:n_rows + 1, :]               # (1, T)
    beta = params_ref[n_rows + 1:n_rows + 2, :]            # (1, T)

    # conv1 + (@ w) composed into one K = B*C*N (=128) matmul; the block-diagonal
    # structure of the operands keeps each row's contraction inside its own batch.
    m1 = jnp.dot(sA_ref[...], A_ref[...], preferred_element_type=jnp.float32)      # (B*T, B*C)
    # conv2 as one K = N*T (full 128-lane row) matmul; rows = (b, c).
    f2 = jnp.dot(sB_ref[...], w2sel_ref[...], preferred_element_type=jnp.float32)  # (B*C, T)

    # Per-batch (T, C) @ (C, T) contraction, already batched by the block-diag m1.
    lg = jnp.dot(m1.astype(bf16), f2.astype(bf16),
                 preferred_element_type=jnp.float32) + b_bias                       # (B*T, T)
    lgs = jax.nn.sigmoid(lg)

    # v @ logits for every batch in one matmul (vblk = kron(I_B, v)).
    y = jnp.dot(vblk_ref[...], lgs.astype(bf16),
                preferred_element_type=jnp.float32)                                 # (B*T, T)

    # BatchNorm1d(T), training-mode batch stats: the permute(0,2,1) in PyTorch makes
    # the BN channel the LAST dim of y; stats over all (b, t) rows, biased variance.
    # One-pass variance: E[x^2] - mean^2.
    # TODO(synk): running_mean / running_var buffer updates (stateful BatchNorm1d
    # training side effect) are not modeled.
    mean = jnp.sum(y, axis=0, keepdims=True) * inv_n                                # (1, T)
    ex2 = jnp.sum(y * y, axis=0, keepdims=True) * inv_n                             # (1, T)
    var = ex2 - mean * mean
    z = (y - mean) * lax.rsqrt(var + eps) * gamma + beta

    # Row-wise softmax over the last dim.
    zmax = jnp.max(z, axis=-1, keepdims=True)
    e = jnp.exp(z - zmax)
    denom = jnp.sum(e, axis=-1, keepdims=True)
    out_ref[...] = e * pl.reciprocal(denom, approx=True)


def tatt1_forward(seq, w1, w2, w, b, v, gamma, beta):
    B, C, N, T = seq.shape
    f32 = jnp.float32
    bf16 = jnp.bfloat16
    seq = seq.astype(f32)
    w1 = jnp.reshape(w1, (C,)).astype(f32)
    w2 = jnp.reshape(w2, (N,)).astype(f32)
    w = w.astype(f32)
    b = b.astype(f32)
    v = v.astype(f32)

    # Wrapper-side layout plumbing (free XLA transposes/reshapes):
    eyeB = jnp.eye(B, dtype=f32)
    sA = jnp.transpose(seq, (0, 3, 1, 2)).reshape(B, T, C * N)             # rows=(b,t), cols=(c,n)
    # Block-diagonal over B: (B*T, B*C*N) so the batched contraction is one matmul.
    sA_blk = (sA[:, :, None, :] * eyeB[:, None, :, None]).reshape(B * T, B * C * N)
    sB = seq.reshape(B * C, N * T)                                         # (B*C, N*T)
    A = (w1[:, None, None] * w[None, :, :]).reshape(C * N, C)              # (C*N, C)
    A_blk = jnp.kron(eyeB, A)                                              # (B*C*N, B*C)
    w2sel = (w2[:, None, None] * jnp.eye(T, dtype=f32)[None, :, :]).reshape(N * T, T)
    vblk = jnp.kron(eyeB, v)                                               # (B*T, B*T)
    # b / gamma / beta merged into one operand (fewer DMA descriptors).
    params = jnp.concatenate(
        [jnp.tile(b, (B, 1)),
         jnp.reshape(gamma, (1, T)).astype(f32),
         jnp.reshape(beta, (1, T)).astype(f32)], axis=0)                   # (B*T+2, T)

    # MXU-fed operands in bf16 (f32 accumulation inside the kernel).
    sA_blk = sA_blk.astype(bf16)
    sB = sB.astype(bf16)
    A_blk = A_blk.astype(bf16)
    w2sel = w2sel.astype(bf16)
    vblk = vblk.astype(bf16)

    flops = int(2 * (B * T) * (B * C * N) * (B * C)      # sA_blk @ A_blk
                + 2 * (B * C) * (N * T) * T              # sB @ w2sel
                + 2 * (B * T) * (B * C) * T              # m1 @ f2
                + 2 * (B * T) * (B * T) * T              # vblk @ lgs
                + 12 * (B * T) * T)                      # elementwise
    transcendentals = int(2 * (B * T) * T + 2 * T + B * T)   # sigmoid + softmax exp + rsqrt + recip
    bytes_accessed = int(2 * (sA_blk.size + sB.size + A_blk.size + w2sel.size + vblk.size)
                         + 4 * params.size + 4 * (B * T) * T)

    vmem = pl.BlockSpec(memory_space=pltpu.MemorySpace.VMEM)
    out = pl.pallas_call(
        _tatt1_kernel,
        out_shape=jax.ShapeDtypeStruct((B * T, T), f32),
        in_specs=[vmem] * 6,
        out_specs=vmem,
        cost_estimate=pl.CostEstimate(flops=flops,
                                      transcendentals=transcendentals,
                                      bytes_accessed=bytes_accessed),
    )(sA_blk, sB, A_blk, w2sel, vblk, params)
    return out.reshape(B, T, T)


def ref_forward(seq, w1, w2, w, b, v, gamma, beta):
    """Pure-JAX f32 reference mirroring the PyTorch forward."""
    eps = 1e-5
    f1 = jnp.einsum('bcnt,c->btn', seq, w1)
    f2 = jnp.einsum('bcnt,n->bct', seq, w2)
    logits = jax.nn.sigmoid(
        jnp.einsum('btc,bcs->bts', jnp.einsum('btn,nc->btc', f1, w), f2) + b)
    logits = jnp.einsum('ts,bsu->btu', v, logits)
    mean = jnp.mean(logits, axis=(0, 1), keepdims=True)
    var = jnp.mean((logits - mean) ** 2, axis=(0, 1), keepdims=True)
    y = (logits - mean) / jnp.sqrt(var + eps) * gamma + beta
    return jax.nn.softmax(y, axis=-1)


if __name__ == "__main__":
    B, c_in, num_nodes, tem_size = 2, 4, 16, 8

    key = jax.random.PRNGKey(0)
    k_seq, k_w1, k_w2, k_w, k_v = jax.random.split(key, 5)

    def xavier(k, shape):
        bound = float(np.sqrt(6.0 / (shape[0] + shape[1])))
        return jax.random.uniform(k, shape, jnp.float32, -bound, bound)

    seq = jax.random.normal(k_seq, (B, c_in, num_nodes, tem_size), jnp.float32)
    # conv weights (out_channels=1, 1x1 kernel -> a vector each), deterministic init
    w1 = jax.random.uniform(k_w1, (c_in,), jnp.float32, -0.5, 0.5)
    w2 = jax.random.uniform(k_w2, (num_nodes,), jnp.float32, -0.25, 0.25)
    w = xavier(k_w, (num_nodes, c_in))
    b = jnp.zeros((tem_size, tem_size), jnp.float32)
    v = xavier(k_v, (tem_size, tem_size))
    gamma = jnp.ones((tem_size,), jnp.float32)   # BatchNorm1d weight
    beta = jnp.zeros((tem_size,), jnp.float32)   # BatchNorm1d bias

    coefs = tatt1_forward(seq, w1, w2, w, b, v, gamma, beta)
    coefs = jax.block_until_ready(coefs)

    ref = ref_forward(seq, w1, w2, w, b, v,
                      gamma.reshape(1, 1, tem_size), beta.reshape(1, 1, tem_size))
    # Tolerance budget reflects bf16 MXU operands (f32 accumulation) vs an f32 reference:
    # softmax outputs agree to ~1e-3..1e-2 absolute.
    np.testing.assert_allclose(np.asarray(coefs), np.asarray(ref), atol=1e-2, rtol=2e-2)
    # Rows of a softmax should still sum to ~1 (approx reciprocal -> ~1e-3 rel).
    np.testing.assert_allclose(np.asarray(coefs).sum(-1), 1.0, atol=5e-3)
    assert coefs.shape == (B, tem_size, tem_size)
    print("KERNEL_OK")
</pallas_src>

<mosaic_0001>
module attributes {stable_mosaic.version = 11 : i64} {
  func.func @_tatt1_kernel(%arg0: memref<16x128xbf16, #tpu.memory_space<vmem>>, %arg1: memref<8x128xbf16, #tpu.memory_space<vmem>>, %arg2: memref<128x8xbf16, #tpu.memory_space<vmem>>, %arg3: memref<128x8xbf16, #tpu.memory_space<vmem>>, %arg4: memref<16x16xbf16, #tpu.memory_space<vmem>>, %arg5: memref<18x8xf32, #tpu.memory_space<vmem>>, %arg6: memref<16x8xf32, #tpu.memory_space<vmem>>) attributes {dimension_semantics = [], scalar_prefetch = 0 : i64, scratch_operands = 0 : i64, tpu.core_type = #tpu.core_type<tc>} {
    %c0 = arith.constant 0 : index
    %c0_0 = arith.constant 0 : index
    %0 = vector.load %arg5[%c0, %c0_0] : memref<18x8xf32, #tpu.memory_space<vmem>>, vector<16x8xf32>
    %c16 = arith.constant 16 : index
    %c0_1 = arith.constant 0 : index
    %1 = vector.load %arg5[%c16, %c0_1] : memref<18x8xf32, #tpu.memory_space<vmem>>, vector<1x8xf32>
    %c17 = arith.constant 17 : index
    %c0_2 = arith.constant 0 : index
    %2 = vector.load %arg5[%c17, %c0_2] : memref<18x8xf32, #tpu.memory_space<vmem>>, vector<1x8xf32>
    %c0_3 = arith.constant 0 : index
    %c0_4 = arith.constant 0 : index
    %3 = vector.load %arg0[%c0_3, %c0_4] : memref<16x128xbf16, #tpu.memory_space<vmem>>, vector<16x128xbf16>
    %c0_5 = arith.constant 0 : index
    %c0_6 = arith.constant 0 : index
    %4 = vector.load %arg2[%c0_5, %c0_6] : memref<128x8xbf16, #tpu.memory_space<vmem>>, vector<128x8xbf16>
    %cst = arith.constant dense<0.000000e+00> : vector<16x8xf32>
    %5 = tpu.matmul %3, %4, %cst {dimension_numbers = #tpu.dot_dimension_numbers<[1], [0], [0], [1], [0, 0, 1, 1], [], []>} : vector<16x128xbf16>, vector<128x8xbf16>, vector<16x8xf32> -> vector<16x8xf32>
    %c0_7 = arith.constant 0 : index
    %c0_8 = arith.constant 0 : index
    %6 = vector.load %arg1[%c0_7, %c0_8] : memref<8x128xbf16, #tpu.memory_space<vmem>>, vector<8x128xbf16>
    %c0_9 = arith.constant 0 : index
    %c0_10 = arith.constant 0 : index
    %7 = vector.load %arg3[%c0_9, %c0_10] : memref<128x8xbf16, #tpu.memory_space<vmem>>, vector<128x8xbf16>
    %cst_11 = arith.constant dense<0.000000e+00> : vector<8x8xf32>
    %8 = tpu.matmul %6, %7, %cst_11 {dimension_numbers = #tpu.dot_dimension_numbers<[1], [0], [0], [1], [0, 0, 1, 1], [], []>} : vector<8x128xbf16>, vector<128x8xbf16>, vector<8x8xf32> -> vector<8x8xf32>
    %9 = arith.truncf %5 : vector<16x8xf32> to vector<16x8xbf16>
    %10 = arith.truncf %8 : vector<8x8xf32> to vector<8x8xbf16>
    %cst_12 = arith.constant dense<0.000000e+00> : vector<16x8xf32>
    %11 = tpu.matmul %9, %10, %cst_12 {dimension_numbers = #tpu.dot_dimension_numbers<[1], [0], [0], [1], [0, 0, 1, 1], [], []>} : vector<16x8xbf16>, vector<8x8xbf16>, vector<16x8xf32> -> vector<16x8xf32>
    %12 = arith.addf %11, %0 : vector<16x8xf32>
    %13 = arith.negf %12 : vector<16x8xf32>
    %14 = math.exp %13 : vector<16x8xf32>
    %cst_13 = arith.constant 1.000000e+00 : f32
    %15 = vector.broadcast %cst_13 : f32 to vector<16x8xf32>
    %16 = arith.addf %15, %14 : vector<16x8xf32>
    %17 = arith.divf %15, %16 : vector<16x8xf32>
    %c0_14 = arith.constant 0 : index
    %c0_15 = arith.constant 0 : index
    %18 = vector.load %arg4[%c0_14, %c0_15] : memref<16x16xbf16, #tpu.memory_space<vmem>>, vector<16x16xbf16>
    %19 = arith.truncf %17 : vector<16x8xf32> to vector<16x8xbf16>
    %cst_16 = arith.constant dense<0.000000e+00> : vector<16x8xf32>
    %20 = tpu.matmul %18, %19, %cst_16 {dimension_numbers = #tpu.dot_dimension_numbers<[1], [0], [0], [1], [0, 0, 1, 1], [], []>} : vector<16x16xbf16>, vector<16x8xbf16>, vector<16x8xf32> -> vector<16x8xf32>
    %cst_17 = arith.constant dense<0.000000e+00> : vector<8xf32>
    %21 = vector.multi_reduction <add>, %20, %cst_17 [0] : vector<16x8xf32> to vector<8xf32>
    %22 = vector.shape_cast %21 : vector<8xf32> to vector<1x8xf32>
    %cst_18 = arith.constant 6.250000e-02 : f32
    %23 = vector.broadcast %cst_18 : f32 to vector<1x8xf32>
    %24 = arith.mulf %22, %23 : vector<1x8xf32>
    %25 = arith.mulf %20, %20 : vector<16x8xf32>
    %cst_19 = arith.constant dense<0.000000e+00> : vector<8xf32>
    %26 = vector.multi_reduction <add>, %25, %cst_19 [0] : vector<16x8xf32> to vector<8xf32>
    %27 = vector.shape_cast %26 : vector<8xf32> to vector<1x8xf32>
    %cst_20 = arith.constant 6.250000e-02 : f32
    %28 = vector.broadcast %cst_20 : f32 to vector<1x8xf32>
    %29 = arith.mulf %27, %28 : vector<1x8xf32>
    %30 = arith.mulf %24, %24 : vector<1x8xf32>
    %31 = arith.subf %29, %30 : vector<1x8xf32>
    %32 = vector.broadcast %24 : vector<1x8xf32> to vector<16x8xf32>
    %33 = arith.subf %20, %32 : vector<16x8xf32>
    %cst_21 = arith.constant 9.99999974E-6 : f32
    %34 = vector.broadcast %cst_21 : f32 to vector<1x8xf32>
    %35 = arith.addf %31, %34 : vector<1x8xf32>
    %36 = math.rsqrt %35 : vector<1x8xf32>
    %37 = vector.broadcast %36 : vector<1x8xf32> to vector<16x8xf32>
    %38 = arith.mulf %33, %37 : vector<16x8xf32>
    %39 = vector.broadcast %1 : vector<1x8xf32> to vector<16x8xf32>
    %40 = arith.mulf %38, %39 : vector<16x8xf32>
    %41 = vector.broadcast %2 : vector<1x8xf32> to vector<16x8xf32>
    %42 = arith.addf %40, %41 : vector<16x8xf32>
    %cst_22 = arith.constant dense<0xFF800000> : vector<16xf32>
    %43 = vector.multi_reduction <maximumf>, %42, %cst_22 [1] : vector<16x8xf32> to vector<16xf32>
    %44 = vector.shape_cast %43 : vector<16xf32> to vector<16x1xf32>
    %45 = vector.broadcast %44 : vector<16x1xf32> to vector<16x8xf32>
    %46 = arith.subf %42, %45 : vector<16x8xf32>
    %47 = math.exp %46 : vector<16x8xf32>
    %cst_23 = arith.constant dense<0.000000e+00> : vector<16xf32>
    %48 = vector.multi_reduction <add>, %47, %cst_23 [1] : vector<16x8xf32> to vector<16xf32>
    %49 = vector.shape_cast %48 : vector<16xf32> to vector<16x1xf32>
    %50 = tpu.reciprocal %49 {approx = true} : vector<16x1xf32> -> vector<16x1xf32>
    %51 = vector.broadcast %50 : vector<16x1xf32> to vector<16x8xf32>
    %52 = arith.mulf %47, %51 : vector<16x8xf32>
    %c0_24 = arith.constant 0 : index
    %c0_25 = arith.constant 0 : index
    %53 = vector.load %arg6[%c0_24, %c0_25] : memref<16x8xf32, #tpu.memory_space<vmem>>, vector<16x8xf32>
    tpu.vector_store %arg6[%c0_24, %c0_25], %52 {strides = array<i32>} : memref<16x8xf32, #tpu.memory_space<vmem>>, vector<16x8xf32>,
    return
  }
}

</mosaic_0001>

<llo_original>
// kernel: tpu_custom_call.1
$region0: #{tpu_custom_call.1}
  #allocation0 [shape = 'u32[]', space=smem, size = 0x4, offset = 0x4, fixed_abs, tag = 'smem constant byte address 0x4 - core index']
  #allocation1 [shape = 'u32[72,128]{1,0:T(1,128)}', space=vmem, size = 0x9000, scoped, tag = 'internal scratch']
  %s0 = inlined_call_operand.vmem [shape: bf16[16,128], index: 0, kind: input, shape index: {}]
  %s1 = inlined_call_operand.vmem [shape: bf16[8,128], index: 1, kind: input, shape index: {}]
  %s2 = inlined_call_operand.vmem [shape: bf16[128,8], index: 2, kind: input, shape index: {}]
  %s3 = inlined_call_operand.vmem [shape: bf16[128,8], index: 3, kind: input, shape index: {}]
  %s4 = inlined_call_operand.vmem [shape: bf16[16,16], index: 4, kind: input, shape index: {}]
  %s5 = inlined_call_operand.vmem [shape: f32[18,8], index: 5, kind: input, shape index: {}]
  %s6 = inlined_call_operand.vmem [shape: f32[16,8], index: 6, kind: output, shape index: {}]
  %s7 = sld [smem:[#allocation0]]
  $region34: #{tpu_custom_call.1} parent=0
    _
  %s9 = ssub.s32 1, %s7
  %s10 = scalar_select 0, %s9, %s7
  // Predicated region
  $region2: #{tpu_custom_call.1} parent=0 // pred_check
    _
  $region3: #{tpu_custom_call.1} parent=0 // pred_check_branch
    %12 = sbr.rel (0) target = $region5
  $region4: #{tpu_custom_call.1} parent=0 // pred_region
    _
  $region5: #{tpu_custom_call.1} parent=0 // pred_fallthru
    _
  // Predicated region
  $region6: #{tpu_custom_call.1} parent=0 // pred_check
    _
  $region7: #{tpu_custom_call.1} parent=0 // pred_check_branch
    %14 = sbr.rel (0) target = $region9
  $region8: #{tpu_custom_call.1} parent=0 // pred_region
    _
  $region9: #{tpu_custom_call.1} parent=0 // pred_fallthru
    _
  // Predicated region
  $region10: #{tpu_custom_call.1} parent=0 // pred_check
    _
  $region11: #{tpu_custom_call.1} parent=0 // pred_check_branch
    %16 = sbr.rel (0) target = $region13
  $region12: #{tpu_custom_call.1} parent=0 // pred_region
    _
  $region13: #{tpu_custom_call.1} parent=0 // pred_fallthru
    _
  // Predicated region
  $region14: #{tpu_custom_call.1} parent=0 // pred_check
    _
  $region15: #{tpu_custom_call.1} parent=0 // pred_check_branch
    %18 = sbr.rel (0) target = $region17
  $region16: #{tpu_custom_call.1} parent=0 // pred_region
    _
  $region17: #{tpu_custom_call.1} parent=0 // pred_fallthru
    _
  // Predicated region
  $region18: #{tpu_custom_call.1} parent=0 // pred_check
    _
  $region19: #{tpu_custom_call.1} parent=0 // pred_check_branch
    %20 = sbr.rel (0) target = $region21
  $region20: #{tpu_custom_call.1} parent=0 // pred_region
    _
  $region21: #{tpu_custom_call.1} parent=0 // pred_fallthru
    _
  // Predicated region
  $region22: #{tpu_custom_call.1} parent=0 // pred_check
    _
  $region23: #{tpu_custom_call.1} parent=0 // pred_check_branch
    %22 = sbr.rel (0) target = $region25
  $region24: #{tpu_custom_call.1} parent=0 // pred_region
    _
  $region25: #{tpu_custom_call.1} parent=0 // pred_fallthru
    _
  %v24 = vld [vmem:[%s5] sm:$0xff]
  %v25 = vld [vmem:[%s5 + $0x8] sm:$0xff]
  %v26 = vld [vmem:[%s5 + $0x10] sm:$0x1]
  %v27 = vld [vmem:[%s5 + $0x11] sm:$0x1]
  %v28 = vld [vmem:[%s0] sm:$0xf]
  %v29 = vld [vmem:[%s0 + $0x4] sm:$0xf]
  %v30 = vld [vmem:[%s2] sm:$0xf]
  %v31 = vld [vmem:[%s2 + $0x4] sm:$0xf]
  %v32 = vld [vmem:[%s2 + $0x8] sm:$0xf]
  %v33 = vld [vmem:[%s2 + $0xc] sm:$0xf]
  %v34 = vld [vmem:[%s2 + $0x10] sm:$0xf]
  %v35 = vld [vmem:[%s2 + $0x14] sm:$0xf]
  %v36 = vld [vmem:[%s2 + $0x18] sm:$0xf]
  %v37 = vld [vmem:[%s2 + $0x1c] sm:$0xf]
  %v38 = vld [vmem:[%s2 + $0x20] sm:$0xf]
  %v39 = vld [vmem:[%s2 + $0x24] sm:$0xf]
  %v40 = vld [vmem:[%s2 + $0x28] sm:$0xf]
  %v41 = vld [vmem:[%s2 + $0x2c] sm:$0xf]
  %v42 = vld [vmem:[%s2 + $0x30] sm:$0xf]
  %v43 = vld [vmem:[%s2 + $0x34] sm:$0xf]
  %v44 = vld [vmem:[%s2 + $0x38] sm:$0xf]
  %v45 = vld [vmem:[%s2 + $0x3c] sm:$0xf]
  %v48 = vunpack.c.l.b16 %v28
  %v49 = vunpack.c.l.b16 %v29
  %v50 = vpack.c.b16 %v49, %v48
  %v68 = vunpack.c.l.b16 %v30
  %v69 = vunpack.c.l.b16 %v31
  %v70 = vunpack.c.l.b16 %v32
  %v71 = vunpack.c.l.b16 %v33
  %v72 = vunpack.c.l.b16 %v34
  %v73 = vunpack.c.l.b16 %v35
  %v74 = vunpack.c.l.b16 %v36
  %v75 = vunpack.c.l.b16 %v37
  %v76 = vunpack.c.l.b16 %v38
  %v77 = vunpack.c.l.b16 %v39
  %v78 = vunpack.c.l.b16 %v40
  %v79 = vunpack.c.l.b16 %v41
  %v80 = vunpack.c.l.b16 %v42
  %v81 = vunpack.c.l.b16 %v43
  %v82 = vunpack.c.l.b16 %v44
  %v83 = vunpack.c.l.b16 %v45
  %v84 = vpack.c.b16 %v69, %v68
  %v85 = vpack.c.b16 %v71, %v70
  %v86 = vpack.c.b16 %v73, %v72
  %v87 = vpack.c.b16 %v75, %v74
  %v88 = vpack.c.b16 %v77, %v76
  %v89 = vpack.c.b16 %v79, %v78
  %v90 = vpack.c.b16 %v81, %v80
  %v91 = vpack.c.b16 %v83, %v82
  %100 = vmatpush.bf16.msra.mxu0 %v91
  %101 = vmatpush.bf16.msra.mxu0 %v90
  %102 = vmatpush.bf16.msra.mxu0 %v89
  %103 = vmatpush.bf16.msra.mxu0 %v88
  %104 = vmatpush.bf16.msra.mxu0 %v87
  %105 = vmatpush.bf16.msra.mxu0 %v86
  %106 = vmatpush.bf16.msra.mxu0 %v85
  %107 = vmatpush.bf16.msra.mxu0 %v84
  %108 = vmatmul.bf16.gmra.mxu0 %v50
  %v109 = vpop.f32.mrf.mxu0
  %v110 = vadd.f32 0.0, %v109
  %v111 = vpop.f32.mrf.mxu0
  %v112 = vadd.f32 0.0, %v111
  %113 = vdwg.mxu0
  %v114 = vld [vmem:[%s1] sm:$0xf]
  %v115 = vld [vmem:[%s3] sm:$0xf]
  %v116 = vld [vmem:[%s3 + $0x4] sm:$0xf]
  %v117 = vld [vmem:[%s3 + $0x8] sm:$0xf]
  %v118 = vld [vmem:[%s3 + $0xc] sm:$0xf]
  %v119 = vld [vmem:[%s3 + $0x10] sm:$0xf]
  %v120 = vld [vmem:[%s3 + $0x14] sm:$0xf]
  %v121 = vld [vmem:[%s3 + $0x18] sm:$0xf]
  %v122 = vld [vmem:[%s3 + $0x1c] sm:$0xf]
  %v123 = vld [vmem:[%s3 + $0x20] sm:$0xf]
  %v124 = vld [vmem:[%s3 + $0x24] sm:$0xf]
  %v125 = vld [vmem:[%s3 + $0x28] sm:$0xf]
  %v126 = vld [vmem:[%s3 + $0x2c] sm:$0xf]
  %v127 = vld [vmem:[%s3 + $0x30] sm:$0xf]
  %v128 = vld [vmem:[%s3 + $0x34] sm:$0xf]
  %v129 = vld [vmem:[%s3 + $0x38] sm:$0xf]
  %v130 = vld [vmem:[%s3 + $0x3c] sm:$0xf]
  %v147 = vunpack.c.l.b16 %v115
  %v148 = vunpack.c.l.b16 %v116
  %v149 = vunpack.c.l.b16 %v117
  %v150 = vunpack.c.l.b16 %v118
  %v151 = vunpack.c.l.b16 %v119
  %v152 = vunpack.c.l.b16 %v120
  %v153 = vunpack.c.l.b16 %v121
  %v154 = vunpack.c.l.b16 %v122
  %v155 = vunpack.c.l.b16 %v123
  %v156 = vunpack.c.l.b16 %v124
  %v157 = vunpack.c.l.b16 %v125
  %v158 = vunpack.c.l.b16 %v126
  %v159 = vunpack.c.l.b16 %v127
  %v160 = vunpack.c.l.b16 %v128
  %v161 = vunpack.c.l.b16 %v129
  %v162 = vunpack.c.l.b16 %v130
  %v163 = vpack.c.b16 %v148, %v147
  %v164 = vpack.c.b16 %v150, %v149
  %v165 = vpack.c.b16 %v152, %v151
  %v166 = vpack.c.b16 %v154, %v153
  %v167 = vpack.c.b16 %v156, %v155
  %v168 = vpack.c.b16 %v158, %v157
  %v169 = vpack.c.b16 %v160, %v159
  %v170 = vpack.c.b16 %v162, %v161
  %179 = vmatpush.bf16.msra.mxu0 %v170
  %180 = vmatpush.bf16.msra.mxu0 %v169
  %181 = vmatpush.bf16.msra.mxu0 %v168
  %182 = vmatpush.bf16.msra.mxu0 %v167
  %183 = vmatpush.bf16.msra.mxu0 %v166
  %184 = vmatpush.bf16.msra.mxu0 %v165
  %185 = vmatpush.bf16.msra.mxu0 %v164
  %186 = vmatpush.bf16.msra.mxu0 %v163
  %187 = vmatmul.bf16.gmra.mxu0 %v114
  %v188 = vpop.f32.mrf.mxu0
  %v189 = vadd.f32 0.0, %v188
  %v190 = vpop.f32.mrf.mxu0
  %191 = vdwg.mxu0
  %v192 = vpack.c.bf16 %v112, %v110
  %v193 = vpack.c.bf16 %v189, %v189
  %vm194 = vcmask 64512
  %v196 = vsel %vm194, %v192, 0
  %vm198 = vcmask 1043456
  %v200 = vsel %vm198, %v193, 0
  %202 = vmatpush.bf16.msra.mxu0 0
  %203 = vmatpush.bf16.msra.mxu0 0
  %204 = vmatpush.bf16.msra.mxu0 0
  %205 = vmatpush.bf16.msra.mxu0 0
  %206 = vmatpush.bf16.msra.mxu0 0
  %207 = vmatpush.bf16.msra.mxu0 0
  %208 = vmatpush.bf16.msra.mxu0 0
  %209 = vmatpush.bf16.msra.mxu0 %v200
  %210 = vmatmul.bf16.gmra.mxu0 %v196
  %v211 = vpop.f32.mrf.mxu0
  %v212 = vadd.f32 %v24, %v211
  %v213 = vpop.f32.mrf.mxu0
  %v214 = vadd.f32 %v25, %v213
  %215 = vdwg.mxu0
  %v216 = vxor.u32 %v212, 2147483648
  %v217 = vxor.u32 %v214, 2147483648
  %v218 = vmul.f32 %v216, 1.442695
  %v219 = vpow.pop %v218
  %v220 = vmul.f32 %v217, 1.442695
  %v221 = vpow.pop %v220
  %v222 = vadd.f32 %v219, 1.0
  %v223 = vadd.f32 %v221, 1.0
  %v224 = vrcp.pop %v222
  %v225 = vmul.f32 %v222, %v224
  %v226 = vsub.f32 1.0, %v225
  %v227 = vmul.f32 %v224, %v226
  %v228 = vadd.f32 %v224, %v227
  %vm229 = vweird.f32 %v222
  %vm230 = vweird.f32 %v224
  %vm231 = vmor %vm229, %vm230
  %v232 = vsel %vm231, %v224, %v228
  %v233 = vand.u32 2147483647, %v222
  %vm234 = vcmp.eq.f32.partialorder %v233, 8.507059e+37
  %v235 = vand.u32 %v222, 2147483648
  %v236 = vor.u32 1.1754944e-38, %v235
  %v237 = vsel %vm234, %v236, %v232
  %v238 = vmul.f32 1.0, %v237
  %v239 = vrcp.pop %v223
  %v240 = vmul.f32 %v223, %v239
  %v241 = vsub.f32 1.0, %v240
  %v242 = vmul.f32 %v239, %v241
  %v243 = vadd.f32 %v239, %v242
  %vm244 = vweird.f32 %v223
  %vm245 = vweird.f32 %v239
  %vm246 = vmor %vm244, %vm245
  %v247 = vsel %vm246, %v239, %v243
  %v248 = vand.u32 2147483647, %v223
  %vm249 = vcmp.eq.f32.partialorder %v248, 8.507059e+37
  %v250 = vand.u32 %v223, 2147483648
  %v251 = vor.u32 1.1754944e-38, %v250
  %v252 = vsel %vm249, %v251, %v247
  %v253 = vmul.f32 1.0, %v252
  %v254 = vld [vmem:[%s4] sm:$0xf]
  %v255 = vld [vmem:[%s4 + $0x4] sm:$0xf]
  %v256 = vpack.c.bf16 %v253, %v238
  %v259 = vunpack.c.l.b16 %v254
  %v260 = vunpack.c.l.b16 %v255
  %v261 = vpack.c.b16 %v260, %v259
  %vm262 = vcmask 130048
  %v264 = vsel %vm262, %v261, 0
  %266 = vmatpush.bf16.msra.mxu0 0
  %267 = vmatpush.bf16.msra.mxu0 0
  %268 = vmatpush.bf16.msra.mxu0 0
  %269 = vmatpush.bf16.msra.mxu0 0
  %270 = vmatpush.bf16.msra.mxu0 0
  %271 = vmatpush.bf16.msra.mxu0 0
  %272 = vmatpush.bf16.msra.mxu0 0
  %273 = vmatpush.bf16.msra.mxu0 %v256
  %274 = vmatmul.bf16.gmra.mxu0 %v264
  %v275 = vpop.f32.mrf.mxu0
  %v276 = vadd.f32 0.0, %v275
  %v277 = vpop.f32.mrf.mxu0
  %v278 = vadd.f32 0.0, %v277
  %279 = vdwg.mxu0
  %v280 = vsel %vm194, %v276, 0.0
  %v281 = vsel %vm194, %v278, 0.0
  %v282 = vadd.f32 %v280, %v281
  %v283 = vrot.slane %v282, 4
  %v284 = vadd.f32 %v282, %v283
  %v285 = vrot.slane %v284, 2
  %v286 = vadd.f32 %v284, %v285
  %v287 = vrot.slane %v286, 1
  %v288 = vadd.f32 %v286, %v287
  %v289 = vmul.f32 %v288, 0.0625
  %v290 = vmul.f32 %v276, %v276
  %v291 = vmul.f32 %v278, %v278
  %v292 = vsel %vm194, %v290, 0.0
  %v293 = vsel %vm194, %v291, 0.0
  %v294 = vadd.f32 %v292, %v293
  %v295 = vrot.slane %v294, 4
  %v296 = vadd.f32 %v294, %v295
  %v297 = vrot.slane %v296, 2
  %v298 = vadd.f32 %v296, %v297
  %v299 = vrot.slane %v298, 1
  %v300 = vadd.f32 %v298, %v299
  %v301 = vmul.f32 %v300, 0.0625
  %v302 = vmul.f32 %v289, %v289
  %v303 = vsub.f32 %v301, %v302
  %v304 = vsub.f32 %v276, %v289
  %v305 = vsub.f32 %v278, %v289
  %v306 = vadd.f32 %v303, 1e-05
  %v307 = vrsqrt.pop %v306
  %v308 = vmul.f32 %v307, %v306
  %v309 = vmul.f32 %v308, %v307
  %v310 = vmul.f32 0.5, %v309
  %v311 = vsub.f32 1.5, %v310
  %v312 = vmul.f32 %v307, %v311
  %vm313 = vweird.f32 %v306
  %vm314 = vweird.f32 %v307
  %vm315 = vmor %vm313, %vm314
  %v316 = vsel %vm315, %v307, %v312
  %v317 = vmul.f32 %v304, %v316
  %v318 = vmul.f32 %v305, %v316
  %v319 = vperm.slane %v26, 0
  %v320 = vmul.f32 %v317, %v319
  %v321 = vmul.f32 %v318, %v319
  %v322 = vperm.slane %v27, 0
  %v323 = vadd.f32 %v320, %v322
  %v324 = vadd.f32 %v321, %v322
  %v325 = vsel %vm194, %v323, -inf
  %326 = vmax.xlane.f32.xlu0 %v325
  %v327 = vpop.xlane.xlu0 %326
  %v328 = vsel %vm194, %v324, -inf
  %329 = vmax.xlane.f32.xlu0 %v328
  %v330 = vpop.xlane.xlu0 %329
  %v331 = vsub.f32 %v323, %v327
  %v332 = vsub.f32 %v324, %v330
  %v333 = vmul.f32 %v331, 1.442695
  %v334 = vpow.pop %v333
  %v335 = vmul.f32 %v332, 1.442695
  %v336 = vpow.pop %v335
  %v337 = vsel %vm194, %v334, 0.0
  %338 = vadd.xlane.f32.xlu0 %v337
  %v339 = vpop.xlane.xlu0 %338
  %v340 = vsel %vm194, %v336, 0.0
  %341 = vadd.xlane.f32.xlu0 %v340
  %v342 = vpop.xlane.xlu0 %341
  %v343 = vrcp.pop %v339
  %v344 = vrcp.pop %v342
  %v345 = vmul.f32 %v334, %v343
  %v346 = vmul.f32 %v336, %v344
  %347 = vst.msk [vmem:[%s6] sm:$0xff] %vm194, %v345
  %348 = vst.msk [vmem:[%s6 + $0x8] sm:$0xff] %vm194, %v346
  // Predicated region
  $region26: #{tpu_custom_call.1} parent=0 // pred_check
    _
  $region27: #{tpu_custom_call.1} parent=0 // pred_check_branch
    %350 = sbr.rel (0) target = $region29
  $region28: #{tpu_custom_call.1} parent=0 // pred_region
    _
  $region29: #{tpu_custom_call.1} parent=0 // pred_fallthru
    _
  // Predicated region
  $region30: #{tpu_custom_call.1} parent=0 // pred_check
    _
  $region31: #{tpu_custom_call.1} parent=0 // pred_check_branch
    %352 = sbr.rel (0) target = $region33
  $region32: #{tpu_custom_call.1} parent=0 // pred_region
    _
  $region33: #{tpu_custom_call.1} parent=0 // pred_fallthru
    _

</llo_original>
